<compile_context>
chip_gen: v7x
topology: tpu7x:2x2x1
jax: 0.10.0
libtpu: 0.0.40
codegen_flags: <defaults>
</compile_context>

<pallas_src>
import functools

import jax
import jax.numpy as jnp
from jax import lax
from jax.experimental import pallas as pl
from jax.experimental.pallas import tpu as pltpu

_LANE = 128
_DEFAULT_BLOCK_BYTES = 4 * 1024 * 1024        # cap per (1, C, T) block
_DEFAULT_FUSED_SLAB_BYTES = 6 * 1024 * 1024   # cap per-batch (C, HW) fused slab
_VMEM_LIMIT = 32 * 1024 * 1024                # safe on v5e/v6e/v7x


def _round_up(x, m):
    return ((x + m - 1) // m) * m


def _pick_spatial_tile(hw, c, itemsize, max_block_bytes):
    """Largest multiple of 128 lanes whose (1, C, T) block stays under the
    byte cap, clamped to the lane-padded spatial extent.  No divisibility
    requirement: the grid uses cdiv and the ragged tail block is masked."""
    max_lanes = (max_block_bytes // (itemsize * max(c, 1))) // _LANE * _LANE
    max_lanes = max(_LANE, max_lanes)
    return min(_round_up(hw, _LANE), max_lanes)


# ---------------------------------------------------------------------------
# across_spatial = False : per-spatial-position channel norm, single pass
# ---------------------------------------------------------------------------
def _normalize_kernel(x_ref, s_ref, o_ref):
    # x_ref: (1, C, T)   s_ref: (C, 1)
    x = x_ref[...].astype(jnp.float32)
    norm = jnp.sum(x * x, axis=1, keepdims=True)             # (1, 1, T)
    inv = lax.rsqrt(norm)                                     # EUP, reduced tensor only
    s = s_ref[...].astype(jnp.float32).reshape(1, s_ref.shape[0], 1)
    # Tail lanes of a ragged block may hold garbage/NaN; the boundary store
    # is masked by Pallas and never writes them back.
    o_ref[...] = ((x * inv) * s).astype(o_ref.dtype)


# ---------------------------------------------------------------------------
# across_spatial = True : fused single pass (per-batch slab fits VMEM)
# ---------------------------------------------------------------------------
def _fused_spatial_kernel(x_ref, s_ref, o_ref, *, hw, masked):
    x = x_ref[...].astype(jnp.float32)                        # (1, C, Tpad)
    if masked:
        lane = lax.broadcasted_iota(jnp.int32, x.shape, 2)
        xm = jnp.where(lane < hw, x, 0.0)                     # zero ragged tail
    else:
        xm = x
    mean_norm = jnp.sum(xm * xm, keepdims=True) * (1.0 / float(hw))   # (1,1,1)
    inv = lax.rsqrt(mean_norm)
    s = s_ref[...].astype(jnp.float32).reshape(1, s_ref.shape[0], 1)
    o_ref[...] = (x * (s * inv)).astype(o_ref.dtype)


# ---------------------------------------------------------------------------
# across_spatial = True fallback, pass 1: accumulate sum(x*x) -> rsqrt(mean)
# (accumulates directly into the resident output block; no scratch)
# ---------------------------------------------------------------------------
def _norm_reduce_kernel(x_ref, inv_ref, *, hw, tile, masked):
    k = pl.program_id(1)

    @pl.when(k == 0)
    def _():
        inv_ref[...] = jnp.zeros_like(inv_ref)

    x = x_ref[...].astype(jnp.float32)                        # (1, C, T)
    if masked:
        lane = lax.broadcasted_iota(jnp.int32, x.shape, 2) + k * tile
        x = jnp.where(lane < hw, x, 0.0)                      # mask ragged tail
    inv_ref[...] += jnp.sum(x * x, keepdims=True)             # (1, 1, 1)

    @pl.when(k == pl.num_programs(1) - 1)
    def _():
        inv_ref[...] = lax.rsqrt(inv_ref[...] * (1.0 / float(hw)))


# ---------------------------------------------------------------------------
# across_spatial = True fallback, pass 2: y = x * (scale * inv_norm)
# ---------------------------------------------------------------------------
def _apply_scalar_norm_kernel(x_ref, inv_ref, s_ref, o_ref):
    x = x_ref[...].astype(jnp.float32)                        # (1, C, T)
    s = s_ref[...].astype(jnp.float32).reshape(1, s_ref.shape[0], 1)
    o_ref[...] = (x * (s * inv_ref[...])).astype(o_ref.dtype)


def normalize(feat, scale, *, across_spatial, channel_shared,
              max_block_bytes=_DEFAULT_BLOCK_BYTES,
              fused_slab_bytes=_DEFAULT_FUSED_SLAB_BYTES):
    """feat: (N, C, H, W). scale: (1,) if channel_shared else (1, C, 1, 1)."""
    N, C, H, W = feat.shape
    HW = H * W
    itemsize = jnp.dtype(feat.dtype).itemsize

    # Flatten spatial dims into the lane axis (reshape of trailing contiguous
    # dims: free). No padding, no post-slice -> minimum HBM traffic.
    x = feat.reshape(N, C, HW)

    # Present scale uniformly as a tiny (C, 1) f32 block (one vreg in VMEM).
    if channel_shared:
        scale_b = jnp.broadcast_to(
            jnp.asarray(scale, jnp.float32).reshape(1, 1), (C, 1))
    else:
        scale_b = jnp.asarray(scale, jnp.float32).reshape(C, 1)

    if not across_spatial:
        T = _pick_spatial_tile(HW, C, itemsize, max_block_bytes)
        K = pl.cdiv(HW, T)
        out_flat = pl.pallas_call(
            _normalize_kernel,
            out_shape=jax.ShapeDtypeStruct((N, C, HW), feat.dtype),
            grid_spec=pltpu.PrefetchScalarGridSpec(
                num_scalar_prefetch=0,
                grid=(N, K),
                in_specs=[
                    pl.BlockSpec((1, C, T), lambda b, k: (b, 0, k)),
                    pl.BlockSpec((C, 1), lambda b, k: (0, 0)),
                ],
                out_specs=pl.BlockSpec((1, C, T), lambda b, k: (b, 0, k)),
            ),
            compiler_params=pltpu.CompilerParams(
                dimension_semantics=("parallel", "parallel"),
                vmem_limit_bytes=_VMEM_LIMIT),
        )(x, scale_b)
        return out_flat.reshape(N, C, H, W)

    # -------------------- across_spatial = True --------------------
    Tpad = _round_up(HW, _LANE)
    slab_bytes = C * Tpad * itemsize

    if slab_bytes <= fused_slab_bytes:
        # Single fused pass: one HBM read + one HBM write (minimum possible).
        out_flat = pl.pallas_call(
            functools.partial(_fused_spatial_kernel, hw=HW,
                              masked=(Tpad != HW)),
            out_shape=jax.ShapeDtypeStruct((N, C, HW), feat.dtype),
            grid_spec=pltpu.PrefetchScalarGridSpec(
                num_scalar_prefetch=0,
                grid=(N,),
                in_specs=[
                    pl.BlockSpec((1, C, Tpad), lambda b: (b, 0, 0)),
                    pl.BlockSpec((C, 1), lambda b: (0, 0)),
                ],
                out_specs=pl.BlockSpec((1, C, Tpad), lambda b: (b, 0, 0)),
            ),
            compiler_params=pltpu.CompilerParams(
                dimension_semantics=("parallel",),
                vmem_limit_bytes=_VMEM_LIMIT),
        )(x, scale_b)
        return out_flat.reshape(N, C, H, W)

    # Fallback for oversized per-batch slabs: two-pass accumulator scheme.
    T = _pick_spatial_tile(HW, C, itemsize, max_block_bytes)
    K = pl.cdiv(HW, T)
    inv = pl.pallas_call(
        functools.partial(_norm_reduce_kernel, hw=HW, tile=T,
                          masked=(HW % T != 0)),
        out_shape=jax.ShapeDtypeStruct((N, 1, 1), jnp.float32),
        grid_spec=pltpu.PrefetchScalarGridSpec(
            num_scalar_prefetch=0,
            grid=(N, K),
            in_specs=[pl.BlockSpec((1, C, T), lambda b, k: (b, 0, k))],
            out_specs=pl.BlockSpec((1, 1, 1), lambda b, k: (b, 0, 0)),
        ),
        compiler_params=pltpu.CompilerParams(
            dimension_semantics=("parallel", "arbitrary"),
            vmem_limit_bytes=_VMEM_LIMIT),
    )(x)
    out_flat = pl.pallas_call(
        _apply_scalar_norm_kernel,
        out_shape=jax.ShapeDtypeStruct((N, C, HW), feat.dtype),
        grid_spec=pltpu.PrefetchScalarGridSpec(
            num_scalar_prefetch=0,
            grid=(N, K),
            in_specs=[
                pl.BlockSpec((1, C, T), lambda b, k: (b, 0, k)),
                pl.BlockSpec((1, 1, 1), lambda b, k: (b, 0, 0)),
                pl.BlockSpec((C, 1), lambda b, k: (0, 0)),
            ],
            out_specs=pl.BlockSpec((1, C, T), lambda b, k: (b, 0, k)),
        ),
        compiler_params=pltpu.CompilerParams(
            dimension_semantics=("parallel", "parallel"),
            vmem_limit_bytes=_VMEM_LIMIT),
    )(x, inv, scale_b)
    return out_flat.reshape(N, C, H, W)


def normalize_ref(feat, scale, *, across_spatial, channel_shared):
    """Pure-JAX reference mirroring the PyTorch forward."""
    f = feat.astype(jnp.float32)
    norm = jnp.sum(f * f, axis=1, keepdims=True)
    if across_spatial:
        norm = jnp.mean(jnp.mean(norm, axis=-1, keepdims=True),
                        axis=-2, keepdims=True)
    f = f / jnp.sqrt(norm)
    if channel_shared:
        s = scale.reshape(1, 1, 1, 1)
    else:
        s = scale.reshape(1, feat.shape[1], 1, 1)
    return (s * f).astype(feat.dtype)


if __name__ == "__main__":
    key = jax.random.PRNGKey(0)
    ok = True

    # (shape, extra kwargs) — the overrides force the multi-tile ragged path
    # and the two-pass across_spatial fallback at small sizes for coverage.
    cases = [
        ((2, 4, 16, 16), {}),                                  # exact lane multiple
        ((2, 4, 10, 10), {}),                                  # ragged single tile
        ((2, 8, 20, 20), {"max_block_bytes": 4096,             # forced T=128, K=4
                          "fused_slab_bytes": 0}),             # forced two-pass
    ]

    for (N, C, H, W), kw in cases:
        x = jax.random.normal(key, (N, C, H, W), dtype=jnp.float32)
        for across_spatial in (False, True):
            for channel_shared in (False, True):
                # deterministic param init: constant 20.0 (matches init.constant)
                if channel_shared:
                    scale = jnp.full((1,), 20.0, dtype=jnp.float32)
                else:
                    scale = jnp.full((1, C, 1, 1), 20.0, dtype=jnp.float32)

                out = normalize(x, scale,
                                across_spatial=across_spatial,
                                channel_shared=channel_shared, **kw)
                out = jax.block_until_ready(out)
                ref = normalize_ref(x, scale,
                                    across_spatial=across_spatial,
                                    channel_shared=channel_shared)
                if not jnp.allclose(out, ref, rtol=1e-5, atol=1e-5):
                    ok = False

    if ok:
        print("KERNEL_OK")
    else:
        print("KERNEL_MISMATCH")
</pallas_src>

<mosaic_0001>
module attributes {stable_mosaic.version = 11 : i64} {
  func.func @_normalize_kernel(%arg0: i32, %arg1: i32, %arg2: memref<1x4x256xf32, #tpu.memory_space<vmem>>, %arg3: memref<4x1xf32, #tpu.memory_space<vmem>>, %arg4: memref<1x4x256xf32, #tpu.memory_space<vmem>>) attributes {dimension_semantics = [#tpu.dimension_semantics<parallel>, #tpu.dimension_semantics<parallel>], iteration_bounds = array<i64: 2, 1>, scalar_prefetch = 0 : i64, scratch_operands = 0 : i64, tpu.core_type = #tpu.core_type<tc>, window_params = [{transform_indices = @transform_0, window_bounds = array<i64: 1, 4, 256>}, {pipeline_mode = #tpu.pipeline_mode<synchronous>, transform_indices = @transform_1, window_bounds = array<i64: 4, 1>}, {transform_indices = @transform_2, window_bounds = array<i64: 1, 4, 256>}]} {
    %c0 = arith.constant 0 : index
    %c0_0 = arith.constant 0 : index
    %c0_1 = arith.constant 0 : index
    %0 = vector.load %arg2[%c0, %c0_0, %c0_1] : memref<1x4x256xf32, #tpu.memory_space<vmem>>, vector<1x4x256xf32>
    %1 = arith.mulf %0, %0 : vector<1x4x256xf32>
    %cst = arith.constant dense<0.000000e+00> : vector<1x256xf32>
    %2 = vector.multi_reduction <add>, %1, %cst [1] : vector<1x4x256xf32> to vector<1x256xf32>
    %3 = vector.shape_cast %2 : vector<1x256xf32> to vector<1x1x256xf32>
    %4 = math.rsqrt %3 : vector<1x1x256xf32>
    %c0_2 = arith.constant 0 : index
    %c0_3 = arith.constant 0 : index
    %5 = vector.load %arg3[%c0_2, %c0_3] : memref<4x1xf32, #tpu.memory_space<vmem>>, vector<4x1xf32>
    %6 = vector.shape_cast %5 : vector<4x1xf32> to vector<1x4x1xf32>
    %7 = vector.broadcast %4 : vector<1x1x256xf32> to vector<1x4x256xf32>
    %8 = arith.mulf %0, %7 : vector<1x4x256xf32>
    %9 = vector.broadcast %6 : vector<1x4x1xf32> to vector<1x4x256xf32>
    %10 = arith.mulf %8, %9 : vector<1x4x256xf32>
    %c0_4 = arith.constant 0 : index
    %c0_5 = arith.constant 0 : index
    %c0_6 = arith.constant 0 : index
    %11 = vector.load %arg4[%c0_4, %c0_5, %c0_6] : memref<1x4x256xf32, #tpu.memory_space<vmem>>, vector<1x4x256xf32>
    tpu.vector_store %arg4[%c0_4, %c0_5, %c0_6], %10 {strides = array<i32>} : memref<1x4x256xf32, #tpu.memory_space<vmem>>, vector<1x4x256xf32>,
    return
  }
  func.func @transform_0(%arg0: i32, %arg1: i32) -> (i32, i32, i32) {
    %c0_i32 = arith.constant 0 : i32
    %c0_i32_0 = arith.constant 0 : i32
    return %arg0, %c0_i32, %arg1 : i32, i32, i32
  }
  func.func @transform_1(%arg0: i32, %arg1: i32) -> (i32, i32) {
    %c0_i32 = arith.constant 0 : i32
    %c0_i32_0 = arith.constant 0 : i32
    %c0_i32_1 = arith.constant 0 : i32
    return %c0_i32, %c0_i32_0 : i32, i32
  }
  func.func @transform_2(%arg0: i32, %arg1: i32) -> (i32, i32, i32) {
    %c0_i32 = arith.constant 0 : i32
    %c0_i32_0 = arith.constant 0 : i32
    return %arg0, %c0_i32, %arg1 : i32, i32, i32
  }
}

</mosaic_0001>

<llo_original>
// kernel: tpu_custom_call.1
$region0: #{tpu_custom_call.1}
  #allocation0 [shape = 'u32[]', space=smem, size = 0x4, offset = 0x4, fixed_abs, tag = 'smem constant byte address 0x4 - core index']
  #allocation1 [shape = 'u32[144,128]{1,0:T(1,128)}', space=vmem, size = 0x12000, scoped, tag = 'internal scratch']
  %s0 = inlined_call_operand.hbm [shape: f32[2,4,256], index: 0, kind: input, shape index: {}]
  %s1 = inlined_call_operand.vmem [shape: f32[4,1], index: 1, kind: input, shape index: {}]
  %s2 = inlined_call_operand.hbm [shape: f32[2,4,256], index: 2, kind: output, shape index: {}]
  %s3 = sld [smem:[#allocation0]]
  $region45: #{tpu_custom_call.1} parent=0
    _
  %s5 = ssub.s32 1, %s3
  %s6 = scalar_select 0, %s5, %s3
  $region1: #{tpu_custom_call.1} parent=0
    #allocation2 [shape = 'u8[8192]{0}', space=vmem, size = 0x2000, scoped, tag = 'input window, operand 0']
    #allocation3 [shape = 's32[2]{0}', space=sflag, size = 0x8, scoped, tag = 'scoped memory for tpu_custom_call.1']
    #allocation4 [shape = 's32[2]{0}', space=sflag, size = 0x8, scoped, tag = 'scoped memory for tpu_custom_call.1']
    #allocation5 [shape = 'u8[8192]{0}', space=vmem, size = 0x2000, scoped, tag = 'output window, operand 0']
    %7 = vsyncpa [#allocation3], 0
    %s8 = scalar_lea.sflag [#allocation3], 1
    %9 = vsyncpa %s8, 0
    %10 = vsyncpa [#allocation4], 0
    %s11 = scalar_lea.sflag [#allocation4], 1
    %12 = vsyncpa %s11, 0
    loop: start=0, step=1, limit=4
    $region2: #{tpu_custom_call.1} parent=1 // loop_pre_header
      _
    $region3: #{tpu_custom_call.1} parent=1 // loop_header
      %s14 = sphi 0, %s18
      %p15 = scmp.ge.s32.totalorder %s14, 4
      %s21 = sphi 0, %s33
      %s22 = sphi 0, %s29
      %s23 = sphi 0, %s21
      %s24 = sphi 0, %s22
      %s25 = sphi 0, %s23
      %s26 = sphi 0, %s24
      %s38 = sphi 0, %s40
      %s41 = sphi 0, %s38
      %s42 = sphi 0, %s41
      %s58 = sphi 0, %s42
      %s62 = sphi 0, %s62
      %s64 = sphi 0, %s62
      %s65 = sphi 0, %s64
      %s79 = sphi 0, %s65
      %s87 = sphi 0, %s89
      %s90 = sphi 0, %s87
      %s91 = sphi 0, %s90
      %s107 = sphi 0, %s91
    $region4: #{tpu_custom_call.1} parent=1 // loop_header_branch
      %17 = sbr.rel (%p15) target = $region8
    $region5: #{tpu_custom_call.1} parent=1 // loop_body
      %s19 = ssub.s32 %s14, 1
      %s20 = ssub.s32 %s14, 2
      %s27 = sadd.s32 1, %s22
      %p28 = scmp.ge.s32.totalorder %s27, 1
      %s29 = scalar_select %p28, 0, %s27
      %s30 = sadd.s32 1, %s21
      %s31 = scalar_select %p28, %s30, %s21
      %p32 = scmp.ge.s32.totalorder %s31, 2
      %s33 = scalar_select %p32, 0, %s31
      %s34 = ssub.s32 %s21, %s33
      %s35 = ssub.s32 %s22, %s29
      %s36 = sor.u32 %s34, %s35
      %p37 = scmp.eq.s32.totalorder %s36, 0
      %s39 = sadd.s32 %s38, 1
      %s40 = scalar_select %p37, %s38, %s39
      %p43 = pneg %p37
      %p44 = scmp.eq.s32.totalorder %s14, 1
      %p45 = por %p43, %p44
      %p46 = scmp.ne.s32.totalorder %s38, %s41
      %p47 = scmp.eq.s32.totalorder %s14, 0
      %p48 = por %p46, %p47
      %p49 = scmp.ne.s32.totalorder %s38, %s41
      %p50 = scmp.eq.s32.totalorder %s19, 1
      %p51 = por %p49, %p50
      %p52 = scmp.ne.s32.totalorder %s41, %s42
      %p53 = scmp.eq.s32.totalorder %s19, 0
      %p54 = por %p52, %p53
      %p55 = scmp.ne.s32.totalorder %s41, %s42
      %p56 = scmp.eq.s32.totalorder %s20, 1
      %p57 = por %p55, %p56
      %p59 = scmp.ne.s32.totalorder %s42, %s58
      %p60 = scmp.eq.s32.totalorder %s20, 0
      %p61 = por %p59, %p60
      %s63 = sadd.s32 %s62, 1
      %p66 = scmp.eq.s32.totalorder %s14, 1
      %p67 = scmp.ne.s32.totalorder %s62, %s64
      %p68 = scmp.eq.s32.totalorder %s14, 0
      %p69 = por %p67, %p68
      %p70 = scmp.ne.s32.totalorder %s62, %s64
      %p71 = scmp.eq.s32.totalorder %s19, 1
      %p72 = por %p70, %p71
      %p73 = scmp.ne.s32.totalorder %s64, %s65
      %p74 = scmp.eq.s32.totalorder %s19, 0
      %p75 = por %p73, %p74
      %p76 = scmp.ne.s32.totalorder %s64, %s65
      %p77 = scmp.eq.s32.totalorder %s20, 1
      %p78 = por %p76, %p77
      %p80 = scmp.ne.s32.totalorder %s65, %s79
      %p81 = scmp.eq.s32.totalorder %s20, 0
      %p82 = por %p80, %p81
      %s83 = ssub.s32 %s21, %s33
      %s84 = ssub.s32 %s22, %s29
      %s85 = sor.u32 %s83, %s84
      %p86 = scmp.eq.s32.totalorder %s85, 0
      %s88 = sadd.s32 %s87, 1
      %s89 = scalar_select %p86, %s87, %s88
      %p92 = pneg %p86
      %p93 = scmp.eq.s32.totalorder %s14, 1
      %p94 = por %p92, %p93
      %p95 = scmp.ne.s32.totalorder %s87, %s90
      %p96 = scmp.eq.s32.totalorder %s14, 0
      %p97 = por %p95, %p96
      %p98 = scmp.ne.s32.totalorder %s87, %s90
      %p99 = scmp.eq.s32.totalorder %s19, 1
      %p100 = por %p98, %p99
      %p101 = scmp.ne.s32.totalorder %s90, %s91
      %p102 = scmp.eq.s32.totalorder %s19, 0
      %p103 = por %p101, %p102
      %p104 = scmp.ne.s32.totalorder %s90, %s91
      %p105 = scmp.eq.s32.totalorder %s20, 1
      %p106 = por %p104, %p105
      %p108 = scmp.ne.s32.totalorder %s91, %s107
      %p109 = scmp.eq.s32.totalorder %s20, 0
      %p110 = por %p108, %p109
      %p111 = scmp.le.s32.totalorder 1, %s14
      %p112 = scmp.lt.s32.totalorder %s14, 3
      %p113 = pnand %p111, %p112
      %p114 = pneg %p113
      // Predicated region
      $region9: #{tpu_custom_call.1} parent=5 // pred_check
        _
      $region10: #{tpu_custom_call.1} parent=5 // pred_check_branch
        %116 = sbr.rel (%p113) target = $region12
      $region11: #{tpu_custom_call.1} parent=5 // pred_region
        %s117 = ssub.s32 %s14, 1
        // Predicated region
        $region13: #{tpu_custom_call.1} parent=11 // pred_check
          %p118 = pneg %p75
        $region14: #{tpu_custom_call.1} parent=11 // pred_check_branch
          %120 = sbr.rel (%p118) target = $region16
        $region15: #{tpu_custom_call.1} parent=11 // pred_region
          _
        $region16: #{tpu_custom_call.1} parent=11 // pred_fallthru
          _
      $region12: #{tpu_custom_call.1} parent=5 // pred_fallthru
        _
      %p121 = scmp.lt.s32.totalorder %s14, 2
      // Predicated region
      $region17: #{tpu_custom_call.1} parent=5 // pred_check
        %p122 = pneg %p121
      $region18: #{tpu_custom_call.1} parent=5 // pred_check_branch
        %124 = sbr.rel (%p122) target = $region20
      $region19: #{tpu_custom_call.1} parent=5 // pred_region
        // Predicated region
        $region21: #{tpu_custom_call.1} parent=19 // pred_check
          %p125 = pneg %p48
        $region22: #{tpu_custom_call.1} parent=19 // pred_check_branch
          %127 = sbr.rel (%p125) target = $region24
        $region23: #{tpu_custom_call.1} parent=19 // pred_region
          %s128 = sand.u32 %s38, 1
          %s129 = scalar_lea.sflag [#allocation3], %s128
          %s130 = sand.u32 %s38, 1
          %s131 = smul.addr %s130, 8
          %s132 = scalar_lea.vmem [#allocation2], %s131
          %s133 = smul.u32 2, %s22
          %s135 = ssub.s32 128, 128
          %136 = vsyncadd %s129, %s135
          %s137 = smul.addr %s21, 2
          %s138 = sadd.s32 %s133, %s137
          %s139 = smul.addr %s138, 64
          %s140 = scalar_lea.hbm %s0, %s139
          %s142 = sshll.u32 %s132, 4
          %s143 = int_to_ptr.vmem [resolvable:$true] %s142
          %145 = dma.hbm_to_vmem [thread:$0]  %s140, 128, %s143, %s129
        $region24: #{tpu_custom_call.1} parent=19 // pred_fallthru
          _
      $region20: #{tpu_custom_call.1} parent=5 // pred_fallthru
        _
      %p146 = scmp.le.s32.totalorder 1, %s14
      %p147 = scmp.lt.s32.totalorder %s14, 3
      %p148 = pnand %p146, %p147
      %p149 = pneg %p148
      // Predicated region
      $region25: #{tpu_custom_call.1} parent=5 // pred_check
        _
      $region26: #{tpu_custom_call.1} parent=5 // pred_check_branch
        %151 = sbr.rel (%p148) target = $region28
      $region27: #{tpu_custom_call.1} parent=5 // pred_region
        %s152 = ssub.s32 %s14, 1
        %s153 = sand.u32 %s41, 1
        %s154 = scalar_lea.sflag [#allocation3], %s153
        %s155 = sand.u32 %s41, 1
        %s156 = smul.addr %s155, 8
        %s157 = scalar_lea.vmem [#allocation2], %s156
        // Predicated region
        $region29: #{tpu_custom_call.1} parent=27 // pred_check
          %p158 = pneg %p54
        $region30: #{tpu_custom_call.1} parent=27 // pred_check_branch
          %160 = sbr.rel (%p158) target = $region32
        $region31: #{tpu_custom_call.1} parent=27 // pred_region
          %161 = dma.done %s154, 128
        $region32: #{tpu_custom_call.1} parent=27 // pred_fallthru
          _
        %s162 = sand.u32 %s41, 1
        %s163 = scalar_lea.sflag [#allocation3], %s162
        %s164 = sand.u32 %s41, 1
        %s165 = smul.addr %s164, 8
        %s166 = scalar_lea.vmem [#allocation2], %s165
        %p167 = pneg %p54
        %p168 = pneg %p51
        %p169 = pneg %p75
        %p170 = pneg %p72
        %p171 = pneg %p103
        %p172 = pneg %p100
        %s173 = sand.u32 %s90, 1
        %s174 = scalar_lea.sflag [#allocation4], %s173
        %s175 = sand.u32 %s90, 1
        %s176 = smul.addr %s175, 8
        %s177 = scalar_lea.vmem [#allocation5], %s176
        %s178 = smul.u32 2, %s24
        %s179 = smul.u32 2, %s24
        %v180 = vld [vmem:[%s157] sm:$0xff]
        %v181 = vmul.f32 %v180, %v180
        %v183 = vcombine.high %v181, %v181
        %vm185 = vcmask 1043456
        %v186 = vsel %vm185, %v181, 0.0
        %v187 = vrot.slane %v186, 4
        %v188 = vadd.f32 %v186, %v187
        %v189 = vrot.slane %v188, 2
        %v190 = vadd.f32 %v188, %v189
        %v191 = vrot.slane %v190, 1
        %v192 = vadd.f32 %v190, %v191
        %v193 = vsel %vm185, %v183, 0.0
        %v194 = vrot.slane %v193, 4
        %v195 = vadd.f32 %v193, %v194
        %v196 = vrot.slane %v195, 2
        %v197 = vadd.f32 %v195, %v196
        %v198 = vrot.slane %v197, 1
        %v199 = vadd.f32 %v197, %v198
        %v200 = vrsqrt.pop %v192
        %v201 = vrsqrt.pop %v199
        %v202 = vld [vmem:[%s1] sm:$0xf]
        %v205 = vcombine.low %v200, %v201
        %v207 = vmul.f32 %v180, %v205
        %209 = vset.pattern.permute.xlu0 0
        %210 = vperm.xlu0 %209, %v202
        %v211 = vpop.permute.xlu0 %210
        %v213 = vunpack.c.l.s4 839922192
        %v214 = vunpack.c.0.s8 %v213
        %v215 = vlaneseq
        %v216 = vshrl.u32 %v215, 7
        %v217 = vsub.s32 %v214, %v216
        %v218 = vrot.slane %v211, %v217
        %v220 = vmul.f32 %v207, %v218
        %221 = vst [vmem:[%s177] sm:$0xff] %v220
        %s222 = sand.u32 %s90, 1
        %s223 = scalar_lea.sflag [#allocation4], %s222
        %s224 = sand.u32 %s90, 1
        %s225 = smul.addr %s224, 8
        %s226 = scalar_lea.vmem [#allocation5], %s225
        // Predicated region
        $region33: #{tpu_custom_call.1} parent=27 // pred_check
          %p227 = pneg %p100
        $region34: #{tpu_custom_call.1} parent=27 // pred_check_branch
          %229 = sbr.rel (%p227) target = $region36
        $region35: #{tpu_custom_call.1} parent=27 // pred_region
          %s230 = smul.u32 2, %s24
          %s232 = ssub.s32 128, 128
          %233 = vsyncadd %s223, %s232
          %s234 = smul.addr %s23, 2
          %s235 = sadd.s32 %s230, %s234
          %s236 = smul.addr %s235, 64
          %s237 = scalar_lea.hbm %s2, %s236
          %s239 = sshll.u32 %s226, 4
          %s240 = int_to_ptr.vmem [resolvable:$true] %s239
          %242 = dma.vmem_to_hbm [thread:$0]  %s240, 128, %s237, %s223
        $region36: #{tpu_custom_call.1} parent=27 // pred_fallthru
          _
      $region28: #{tpu_custom_call.1} parent=5 // pred_fallthru
        _
      %p243 = scmp.le.s32.totalorder 2, %s14
      // Predicated region
      $region37: #{tpu_custom_call.1} parent=5 // pred_check
        %p244 = pneg %p243
      $region38: #{tpu_custom_call.1} parent=5 // pred_check_branch
        %246 = sbr.rel (%p244) target = $region40
      $region39: #{tpu_custom_call.1} parent=5 // pred_region
        %s247 = ssub.s32 %s14, 2
        // Predicated region
        $region41: #{tpu_custom_call.1} parent=39 // pred_check
          %p248 = pneg %p106
        $region42: #{tpu_custom_call.1} parent=39 // pred_check_branch
          %250 = sbr.rel (%p248) target = $region44
        $region43: #{tpu_custom_call.1} parent=39 // pred_region
          %s251 = sand.u32 %s91, 1
          %s252 = scalar_lea.sflag [#allocation4], %s251
          %s253 = sand.u32 %s91, 1
          %s254 = smul.addr %s253, 8
          %s255 = scalar_lea.vmem [#allocation5], %s254
          %256 = dma.done %s252, 128
        $region44: #{tpu_custom_call.1} parent=39 // pred_fallthru
          _
      $region40: #{tpu_custom_call.1} parent=5 // pred_fallthru
        _
    $region6: #{tpu_custom_call.1} parent=1 // loop_footer
      %s18 = sadd.s32 1, %s14
    $region7: #{tpu_custom_call.1} parent=1 // loop_footer_branch
      %13 = sbr.rel target = $region3
    $region8: #{tpu_custom_call.1} parent=1 // loop_exit
      _
    %257 = vsyncpa [#allocation3], 1
    %s258 = scalar_lea.sflag [#allocation3], 1
    %259 = vsyncpa %s258, 1
    %260 = vsyncpa [#allocation4], 1
    %s261 = scalar_lea.sflag [#allocation4], 1
    %262 = vsyncpa %s261, 1

</llo_original>
